<compile_context>
chip_gen: v5e
topology: v5e:2x2
jax: 0.10.0
libtpu: 0.0.40
codegen_flags: <defaults>
</compile_context>

<pallas_src>
import jax
import jax.numpy as jnp
from jax import lax
from jax.experimental import pallas as pl
from jax.experimental.pallas import tpu as pltpu


# ---------------------------------------------------------------------------
# Generation-aware VMEM budget (v5e/v6e: 128 MiB physical, v7x: 64 MiB).
# ---------------------------------------------------------------------------
def _vmem_budget_and_limit():
    cap = 64 * 1024 * 1024                     # conservative fallback (v7x)
    try:
        info = pltpu.get_tpu_info()
        cap_attr = getattr(info, "vmem_capacity_bytes", None)
        if cap_attr:
            cap = int(cap_attr)
    except Exception:
        pass
    limit = (3 * cap) // 4                     # 48 MiB on v7x, 96 MiB on v5e/v6e
    budget = max(limit - 8 * 1024 * 1024, limit // 2)   # headroom under the limit
    return budget, limit


def _bilinear_matrix(in_size: int, scale: int = 2) -> jnp.ndarray:
    """Interpolation matrix (scale*in, in) matching nn.Upsample(mode='bilinear',
    align_corners=False) along one axis (half-pixel centres, edge clamped)."""
    out_size = in_size * scale
    dst = jnp.arange(out_size, dtype=jnp.float32)
    src = jnp.maximum((dst + 0.5) / scale - 0.5, 0.0)
    idx0 = jnp.minimum(jnp.floor(src).astype(jnp.int32), in_size - 1)
    idx1 = jnp.minimum(idx0 + 1, in_size - 1)
    frac = src - idx0.astype(jnp.float32)
    return (jax.nn.one_hot(idx0, in_size, dtype=jnp.float32) * (1.0 - frac)[:, None]
            + jax.nn.one_hot(idx1, in_size, dtype=jnp.float32) * frac[:, None])


def _choose_block_channels(nc: int, per_ch_bytes: int, fixed_bytes: int,
                           budget: int) -> int:
    """Channel-block size TC.  `nc` is a multiple of 8; every candidate is an
    8-aligned divisor of nc (sublane-aligned), fits the VMEM budget, prefers
    MXU-friendly multiples of 256 and >= 2 grid steps (megacore)."""
    cap = (budget - fixed_bytes) // max(per_ch_bytes, 1)
    divs = [d for d in range(8, nc + 1, 8) if nc % d == 0]
    fitting = [d for d in divs if d <= cap] or [min(divs)]

    def pick(pool):
        multi = [d for d in pool if nc // d >= 2]
        return max(multi) if multi else max(pool)

    m256 = [d for d in fitting if d % 256 == 0]
    return pick(m256) if m256 else pick(fitting)


# ---------------------------------------------------------------------------
# Kernels
# ---------------------------------------------------------------------------
def _fused_kernel(x_ref, k_ref, low_ref, out_ref):
    # x_ref (TC, H*W); k_ref (H*W, COL) bf16; low/out (TC, COL)
    x = x_ref[...]
    k = k_ref[...]
    if k.dtype != x.dtype:
        k = k.astype(x.dtype)          # exact: scale-2 bilinear weights are dyadic
    up = jnp.dot(x, k, preferred_element_type=jnp.float32)   # MXU, f32 accumulate
    out_ref[...] = (up + low_ref[...].astype(jnp.float32)).astype(out_ref.dtype)


def _separable_kernel(x_ref, wh_ref, wwt_ref, low_ref, out_ref):
    # x_ref (TC*H, W); wh_ref (OH, H); wwt_ref (W, OW); low/out (TC*OH, OW)
    oh, h = wh_ref.shape
    ow = wwt_ref.shape[1]
    tc = x_ref.shape[0] // h
    x = x_ref[...]
    wwt = wwt_ref[...]
    if wwt.dtype != x.dtype:
        wwt = wwt.astype(x.dtype)      # exact dyadic weights
    # Column pass: one 2-D MXU matmul over all rows of all channels in the block.
    t = jnp.dot(x, wwt, preferred_element_type=jnp.float32)        # (TC*H, OW)
    t = t.reshape(tc, h, ow)
    # Row pass: per-channel batched matmul  Wh @ t[c]  ->  (TC, OH, OW).
    wh_b = jnp.broadcast_to(wh_ref[...].astype(jnp.float32), (tc, oh, h))
    up = lax.dot_general(wh_b, t,
                         dimension_numbers=(((2,), (1,)), ((0,), (0,))),
                         preferred_element_type=jnp.float32)
    up = up.reshape(tc * oh, ow)
    out_ref[...] = (up + low_ref[...].astype(jnp.float32)).astype(out_ref.dtype)


# ---------------------------------------------------------------------------
# Host wrappers
# ---------------------------------------------------------------------------
def _upsample_add_fused(x, low_map, budget, limit, donate_low_map):
    n, c, h, w = x.shape
    oh, ow = 2 * h, 2 * w
    nc, hw, ohw = n * c, h * w, oh * ow
    out_dtype = x.dtype

    # Fused operator K[h*W+w, p*OW+q] = Wh[p,h]*Ww[q,w], built once on the host
    # (Ww transpose hoisted out of the kernel); bf16 storage is exact here.
    wh = _bilinear_matrix(h)
    ww = _bilinear_matrix(w)
    k_op = jnp.einsum('ph,qw->hwpq', wh, ww).reshape(hw, ohw).astype(jnp.bfloat16)

    # Free, contiguous reshapes to lane-dense 2-D layouts.
    x2 = x.reshape(nc, hw)
    low2 = low_map.reshape(nc, ohw)

    # Pad the channel axis to a multiple of 8 so channel blocks are always
    # sublane-aligned (review correctness concern on the divisor fallback).
    nc_pad = ((nc + 7) // 8) * 8
    if nc_pad != nc:
        x2 = jnp.pad(x2, ((0, nc_pad - nc), (0, 0)))
        low2 = jnp.pad(low2, ((0, nc_pad - nc), (0, 0)))

    x_item = jnp.dtype(x2.dtype).itemsize
    low_item = jnp.dtype(low2.dtype).itemsize
    out_item = jnp.dtype(out_dtype).itemsize
    k_item = 2                                             # bf16 operator

    per_ch = 2 * (hw * x_item + ohw * (low_item + out_item))   # double-buffered slabs
    k_vmem = hw * ohw * k_item      # single-buffered K (or two half-width buffers)
    assert k_vmem + 8 * per_ch <= budget, (
        "feature map too large for the fused-operator path")

    tc = _choose_block_channels(nc_pad, per_ch, k_vmem, budget)
    rows = nc_pad // tc
    # Guarantee >= 2 grid steps for v7x's two TensorCores: if there is only one
    # channel block, split the lane axis (blocks stay multiples of 128 ->
    # unmasked vst).
    ncol = 2 if (rows == 1 and ohw % 256 == 0) else 1
    colblk = ohw // ncol
    grid = (rows, ncol)

    cost = pl.CostEstimate(
        flops=2 * nc_pad * hw * ohw,
        transcendentals=0,
        bytes_accessed=(nc_pad * hw * x_item + hw * ohw * k_item
                        + nc_pad * ohw * (low_item + out_item)))

    aliases = {}
    if donate_low_map and low2.dtype == out_dtype:
        aliases = {2: 0}            # reuse the low_map slab buffer for the output

    def build_k_spec(single_buffer):
        if ncol == 1 and single_buffer:
            try:
                # Grid-invariant operator -> no second pipeline buffer.
                return pl.BlockSpec((hw, ohw), lambda i, j: (0, 0),
                                    pipeline_mode=pl.Buffered(1))
            except TypeError:
                pass
        return pl.BlockSpec((hw, colblk), lambda i, j: (0, j))

    def call(k_spec):
        return pl.pallas_call(
            _fused_kernel,
            out_shape=jax.ShapeDtypeStruct((nc_pad, ohw), out_dtype),
            grid_spec=pltpu.PrefetchScalarGridSpec(
                num_scalar_prefetch=0,
                grid=grid,
                in_specs=[
                    pl.BlockSpec((tc, hw), lambda i, j: (i, 0)),      # x slab
                    k_spec,                                           # fused operator
                    pl.BlockSpec((tc, colblk), lambda i, j: (i, j)),  # low_map slab
                ],
                out_specs=pl.BlockSpec((tc, colblk), lambda i, j: (i, j)),
            ),
            compiler_params=pltpu.CompilerParams(
                dimension_semantics=("parallel", "parallel"),
                vmem_limit_bytes=limit),
            cost_estimate=cost,
            input_output_aliases=aliases,
        )(x2, k_op, low2)

    try:
        out2 = call(build_k_spec(single_buffer=True))
    except Exception:
        if ncol != 1:
            raise
        out2 = call(build_k_spec(single_buffer=False))   # fall back to default buffering

    return out2[:nc].reshape(n, c, oh, ow)


def _upsample_add_separable(x, low_map, budget, limit, donate_low_map):
    n, c, h, w = x.shape
    oh, ow = 2 * h, 2 * w
    nc = n * c
    out_dtype = x.dtype

    wh = _bilinear_matrix(h).astype(jnp.bfloat16)       # (OH, H), exact in bf16
    wwt = _bilinear_matrix(w).T.astype(jnp.bfloat16)    # (W, OW), transpose on host

    nc_pad = ((nc + 7) // 8) * 8
    x3 = x.reshape(nc, h, w)
    low3 = low_map.reshape(nc, oh * ow)
    if nc_pad != nc:
        x3 = jnp.pad(x3, ((0, nc_pad - nc), (0, 0), (0, 0)))
        low3 = jnp.pad(low3, ((0, nc_pad - nc), (0, 0)))
    x2 = x3.reshape(nc_pad * h, w)           # lane dim = W
    low2 = low3.reshape(nc_pad * oh, ow)     # lane dim = OW

    x_item = jnp.dtype(x.dtype).itemsize
    low_item = jnp.dtype(low_map.dtype).itemsize
    out_item = jnp.dtype(out_dtype).itemsize

    # Per-channel VMEM: double-buffered slabs + in-kernel f32 temporaries.
    per_ch = (2 * (h * w * x_item + oh * ow * (low_item + out_item))
              + 4 * (h * ow + oh * h + oh * ow))
    fixed = 2 * 2 * (oh * h + w * ow)        # double-buffered bf16 operators (KBs)
    tc = _choose_block_channels(nc_pad, per_ch, fixed, budget)
    grid = (nc_pad // tc,)

    cost = pl.CostEstimate(
        flops=2 * nc_pad * h * w * ow + 2 * nc_pad * oh * h * ow,
        transcendentals=0,
        bytes_accessed=(nc_pad * h * w * x_item + 2 * (oh * h + w * ow)
                        + nc_pad * oh * ow * (low_item + out_item)))

    aliases = {}
    if donate_low_map and low2.dtype == out_dtype:
        aliases = {3: 0}

    # TODO(synk): when OW < 128 the output stores are lane-masked; a lane-dense
    # repack was intentionally skipped to keep all in-kernel reshapes layout-safe.
    out2 = pl.pallas_call(
        _separable_kernel,
        out_shape=jax.ShapeDtypeStruct((nc_pad * oh, ow), out_dtype),
        grid_spec=pltpu.PrefetchScalarGridSpec(
            num_scalar_prefetch=0,
            grid=grid,
            in_specs=[
                pl.BlockSpec((tc * h, w), lambda i: (i, 0)),      # x rows
                pl.BlockSpec((oh, h), lambda i: (0, 0)),          # Wh (tiny)
                pl.BlockSpec((w, ow), lambda i: (0, 0)),          # Ww^T (tiny)
                pl.BlockSpec((tc * oh, ow), lambda i: (i, 0)),    # low_map rows
            ],
            out_specs=pl.BlockSpec((tc * oh, ow), lambda i: (i, 0)),
        ),
        compiler_params=pltpu.CompilerParams(
            dimension_semantics=("parallel",),
            vmem_limit_bytes=limit),
        cost_estimate=cost,
        input_output_aliases=aliases,
    )(x2, wh, wwt, low2)

    return out2.reshape(nc_pad, oh, ow)[:nc].reshape(n, c, oh, ow)


def upsample_add(x: jnp.ndarray, low_map: jnp.ndarray, *,
                 donate_low_map: bool = False) -> jnp.ndarray:
    """Bilinear 2x upsample (align_corners=False) of x (NCHW) plus low_map."""
    n, c, h, w = x.shape
    oh, ow = 2 * h, 2 * w
    assert low_map.shape == (n, c, oh, ow), "low_map must match upsampled shape"
    nc, hw, ohw = n * c, h * w, oh * ow

    budget, limit = _vmem_budget_and_limit()

    x_item = jnp.dtype(x.dtype).itemsize
    low_item = jnp.dtype(low_map.dtype).itemsize
    out_item = jnp.dtype(x.dtype).itemsize
    k_hbm = hw * ohw * 2                                  # fused operator, bf16
    act_bytes = nc * (hw * x_item + ohw * (low_item + out_item))
    per_ch_fused = 2 * (hw * x_item + ohw * (low_item + out_item))

    # Fused single-matmul path only when the activation stream dominates the
    # operator read and the operator comfortably fits in VMEM; otherwise the
    # separable two-matmul path (tiny operators, ~10x fewer FLOPs).
    use_fused = (hw < 1024
                 and act_bytes >= 4 * k_hbm
                 and k_hbm + 8 * per_ch_fused <= budget)
    if use_fused:
        return _upsample_add_fused(x, low_map, budget, limit, donate_low_map)
    return _upsample_add_separable(x, low_map, budget, limit, donate_low_map)


# ---------------------------------------------------------------------------
# Reference + self-test
# ---------------------------------------------------------------------------
def _reference(x, low_map):
    wh = _bilinear_matrix(x.shape[2])
    ww = _bilinear_matrix(x.shape[3])
    up = jnp.einsum('ph,nchw,qw->ncpq', wh, x.astype(jnp.float32), ww,
                    precision=lax.Precision.HIGHEST)
    return up + low_map.astype(jnp.float32)


if __name__ == "__main__":
    key = jax.random.PRNGKey(0)
    k1, k2, k3, k4 = jax.random.split(key, 4)

    # Case 1: the module's small-shape regime (N*C small) -> separable path.
    N, C, H, W = 2, 4, 16, 16
    x1 = jax.random.normal(k1, (N, C, H, W), dtype=jnp.float32)
    low1 = jax.random.normal(k2, (N, C, 2 * H, 2 * W), dtype=jnp.float32)
    out1 = jax.block_until_ready(upsample_add(x1, low1))
    ref1 = _reference(x1, low1)
    assert out1.shape == (N, C, 2 * H, 2 * W)
    err1 = float(jnp.max(jnp.abs(out1 - ref1)))
    assert err1 < 1e-3, err1

    # Case 2: larger channel count -> fused-operator path (validates dispatch).
    N2, C2 = 2, 256
    x2 = jax.random.normal(k3, (N2, C2, H, W), dtype=jnp.float32)
    low2 = jax.random.normal(k4, (N2, C2, 2 * H, 2 * W), dtype=jnp.float32)
    out2 = jax.block_until_ready(upsample_add(x2, low2))
    ref2 = _reference(x2, low2)
    assert out2.shape == (N2, C2, 2 * H, 2 * W)
    err2 = float(jnp.max(jnp.abs(out2 - ref2)))
    assert err2 < 1e-3, err2

    print("KERNEL_OK")
</pallas_src>

<mosaic_0001>
module attributes {stable_mosaic.version = 11 : i64} {
  func.func @_separable_kernel(%arg0: i32, %arg1: memref<128x16xf32, #tpu.memory_space<vmem>>, %arg2: memref<32x16xbf16, #tpu.memory_space<vmem>>, %arg3: memref<16x32xbf16, #tpu.memory_space<vmem>>, %arg4: memref<256x32xf32, #tpu.memory_space<vmem>>, %arg5: memref<256x32xf32, #tpu.memory_space<vmem>>) attributes {dimension_semantics = [#tpu.dimension_semantics<parallel>], iteration_bounds = array<i64: 1>, scalar_prefetch = 0 : i64, scratch_operands = 0 : i64, tpu.core_type = #tpu.core_type<tc>, window_params = [{transform_indices = @transform_0, window_bounds = array<i64: 128, 16>}, {pipeline_mode = #tpu.pipeline_mode<synchronous>, transform_indices = @transform_1, window_bounds = array<i64: 32, 16>}, {pipeline_mode = #tpu.pipeline_mode<synchronous>, transform_indices = @transform_2, window_bounds = array<i64: 16, 32>}, {transform_indices = @transform_3, window_bounds = array<i64: 256, 32>}, {transform_indices = @transform_4, window_bounds = array<i64: 256, 32>}]} {
    %c0 = arith.constant 0 : index
    %c0_0 = arith.constant 0 : index
    %0 = vector.load %arg1[%c0, %c0_0] : memref<128x16xf32, #tpu.memory_space<vmem>>, vector<128x16xf32>
    %c0_1 = arith.constant 0 : index
    %c0_2 = arith.constant 0 : index
    %1 = vector.load %arg3[%c0_1, %c0_2] : memref<16x32xbf16, #tpu.memory_space<vmem>>, vector<16x32xbf16>
    %2 = arith.extf %1 : vector<16x32xbf16> to vector<16x32xf32>
    %cst = arith.constant dense<0.000000e+00> : vector<128x32xf32>
    %3 = tpu.matmul %0, %2, %cst {dimension_numbers = #tpu.dot_dimension_numbers<[1], [0], [0], [1], [0, 0, 1, 1], [], []>} : vector<128x16xf32>, vector<16x32xf32>, vector<128x32xf32> -> vector<128x32xf32>
    %4 = vector.shape_cast %3 : vector<128x32xf32> to vector<8x16x32xf32>
    %c0_3 = arith.constant 0 : index
    %c0_4 = arith.constant 0 : index
    %5 = vector.load %arg2[%c0_3, %c0_4] : memref<32x16xbf16, #tpu.memory_space<vmem>>, vector<32x16xbf16>
    %6 = arith.extf %5 : vector<32x16xbf16> to vector<32x16xf32>
    %7 = vector.shape_cast %6 : vector<32x16xf32> to vector<1x32x16xf32>
    %8 = vector.broadcast %7 : vector<1x32x16xf32> to vector<8x32x16xf32>
    %cst_5 = arith.constant dense<0.000000e+00> : vector<8x32x32xf32>
    %9 = tpu.matmul %8, %4, %cst_5 {dimension_numbers = #tpu.dot_dimension_numbers<[2], [1], [1], [2], [0, 0, 0, 1, 1, 2], [0], [0]>} : vector<8x32x16xf32>, vector<8x16x32xf32>, vector<8x32x32xf32> -> vector<8x32x32xf32>
    %10 = vector.shape_cast %9 : vector<8x32x32xf32> to vector<256x32xf32>
    %c0_6 = arith.constant 0 : index
    %c0_7 = arith.constant 0 : index
    %11 = vector.load %arg4[%c0_6, %c0_7] : memref<256x32xf32, #tpu.memory_space<vmem>>, vector<256x32xf32>
    %12 = arith.addf %10, %11 : vector<256x32xf32>
    %c0_8 = arith.constant 0 : index
    %c0_9 = arith.constant 0 : index
    %13 = vector.load %arg5[%c0_8, %c0_9] : memref<256x32xf32, #tpu.memory_space<vmem>>, vector<256x32xf32>
    tpu.vector_store %arg5[%c0_8, %c0_9], %12 {strides = array<i32>} : memref<256x32xf32, #tpu.memory_space<vmem>>, vector<256x32xf32>,
    return
  }
  func.func @transform_0(%arg0: i32) -> (i32, i32) {
    %c0_i32 = arith.constant 0 : i32
    %c0_i32_0 = arith.constant 0 : i32
    return %arg0, %c0_i32 : i32, i32
  }
  func.func @transform_1(%arg0: i32) -> (i32, i32) {
    %c0_i32 = arith.constant 0 : i32
    %c0_i32_0 = arith.constant 0 : i32
    %c0_i32_1 = arith.constant 0 : i32
    return %c0_i32, %c0_i32_0 : i32, i32
  }
  func.func @transform_2(%arg0: i32) -> (i32, i32) {
    %c0_i32 = arith.constant 0 : i32
    %c0_i32_0 = arith.constant 0 : i32
    %c0_i32_1 = arith.constant 0 : i32
    return %c0_i32, %c0_i32_0 : i32, i32
  }
  func.func @transform_3(%arg0: i32) -> (i32, i32) {
    %c0_i32 = arith.constant 0 : i32
    %c0_i32_0 = arith.constant 0 : i32
    return %arg0, %c0_i32 : i32, i32
  }
  func.func @transform_4(%arg0: i32) -> (i32, i32) {
    %c0_i32 = arith.constant 0 : i32
    %c0_i32_0 = arith.constant 0 : i32
    return %arg0, %c0_i32 : i32, i32
  }
}

</mosaic_0001>

<llo_original>
// kernel: tpu_custom_call.1
$region0: #{tpu_custom_call.1}
  #allocation0 [shape = 'u32[]', space=smem, size = 0x4, offset = 0x4, fixed_abs, tag = 'smem constant byte address 0x4 - core index']
  #allocation1 [shape = 'u32[72,128]{1,0:T(1,128)}', space=vmem, size = 0x9000, scoped, tag = 'internal scratch']
  %s0 = inlined_call_operand.vmem [shape: f32[128,16], index: 0, kind: input, shape index: {}]
  %s1 = inlined_call_operand.vmem [shape: bf16[32,16], index: 1, kind: input, shape index: {}]
  %s2 = inlined_call_operand.vmem [shape: bf16[16,32], index: 2, kind: input, shape index: {}]
  %s3 = inlined_call_operand.vmem [shape: f32[256,32], index: 3, kind: input, shape index: {}]
  %s4 = inlined_call_operand.vmem [shape: f32[256,32], index: 4, kind: output, shape index: {}]
  %s5 = sld [smem:[#allocation0]]
  $region26: #{tpu_custom_call.1} parent=0
    _
  %s7 = ssub.s32 1, %s5
  %s8 = scalar_select 0, %s7, %s5
  // Predicated region
  $region2: #{tpu_custom_call.1} parent=0 // pred_check
    _
  $region3: #{tpu_custom_call.1} parent=0 // pred_check_branch
    %10 = sbr.rel (0) target = $region5
  $region4: #{tpu_custom_call.1} parent=0 // pred_region
    _
  $region5: #{tpu_custom_call.1} parent=0 // pred_fallthru
    _
  // Predicated region
  $region6: #{tpu_custom_call.1} parent=0 // pred_check
    _
  $region7: #{tpu_custom_call.1} parent=0 // pred_check_branch
    %12 = sbr.rel (0) target = $region9
  $region8: #{tpu_custom_call.1} parent=0 // pred_region
    _
  $region9: #{tpu_custom_call.1} parent=0 // pred_fallthru
    _
  // Predicated region
  $region10: #{tpu_custom_call.1} parent=0 // pred_check
    _
  $region11: #{tpu_custom_call.1} parent=0 // pred_check_branch
    %14 = sbr.rel (0) target = $region13
  $region12: #{tpu_custom_call.1} parent=0 // pred_region
    _
  $region13: #{tpu_custom_call.1} parent=0 // pred_fallthru
    _
  // Predicated region
  $region14: #{tpu_custom_call.1} parent=0 // pred_check
    _
  $region15: #{tpu_custom_call.1} parent=0 // pred_check_branch
    %16 = sbr.rel (0) target = $region17
  $region16: #{tpu_custom_call.1} parent=0 // pred_region
    _
  $region17: #{tpu_custom_call.1} parent=0 // pred_fallthru
    _
  %v17 = vld [vmem:[%s0] sm:$0xff]
  %v18 = vld [vmem:[%s0 + $0x8] sm:$0xff]
  %v19 = vld [vmem:[%s0 + $0x10] sm:$0xff]
  %v20 = vld [vmem:[%s0 + $0x18] sm:$0xff]
  %v21 = vld [vmem:[%s0 + $0x20] sm:$0xff]
  %v22 = vld [vmem:[%s0 + $0x28] sm:$0xff]
  %v23 = vld [vmem:[%s0 + $0x30] sm:$0xff]
  %v24 = vld [vmem:[%s0 + $0x38] sm:$0xff]
  %v25 = vld [vmem:[%s0 + $0x40] sm:$0xff]
  %v26 = vld [vmem:[%s0 + $0x48] sm:$0xff]
  %v27 = vld [vmem:[%s0 + $0x50] sm:$0xff]
  %v28 = vld [vmem:[%s0 + $0x58] sm:$0xff]
  %v29 = vld [vmem:[%s0 + $0x60] sm:$0xff]
  %v30 = vld [vmem:[%s0 + $0x68] sm:$0xff]
  %v31 = vld [vmem:[%s0 + $0x70] sm:$0xff]
  %v32 = vld [vmem:[%s0 + $0x78] sm:$0xff]
  %v33 = vld [vmem:[%s2] sm:$0xf]
  %v34 = vld [vmem:[%s2 + $0x4] sm:$0xf]
  %v35 = vunpack.c.l.bf16 %v33
  %v36 = vunpack.c.l.bf16 %v34
  %vm37 = vcmask 130048
  %v39 = vsel %vm37, %v17, 0
  %v42 = vsel %vm37, %v18, 0
  %v45 = vsel %vm37, %v19, 0
  %v48 = vsel %vm37, %v20, 0
  %v51 = vsel %vm37, %v21, 0
  %v54 = vsel %vm37, %v22, 0
  %v57 = vsel %vm37, %v23, 0
  %v60 = vsel %vm37, %v24, 0
  %v63 = vsel %vm37, %v25, 0
  %v66 = vsel %vm37, %v26, 0
  %v69 = vsel %vm37, %v27, 0
  %v72 = vsel %vm37, %v28, 0
  %v75 = vsel %vm37, %v29, 0
  %v78 = vsel %vm37, %v30, 0
  %v81 = vsel %vm37, %v31, 0
  %v84 = vsel %vm37, %v32, 0
  %86 = vmatpush.msra.mxu0 0.0
  %87 = vmatpush.msra.mxu0 0.0
  %88 = vmatpush.msra.mxu0 0.0
  %89 = vmatpush.msra.mxu0 0.0
  %90 = vmatpush.msra.mxu0 0.0
  %91 = vmatpush.msra.mxu0 0.0
  %92 = vmatpush.msra.mxu0 0.0
  %93 = vmatpush.msra.mxu0 0.0
  %94 = vmatpush.msra.mxu0 0.0
  %95 = vmatpush.msra.mxu0 0.0
  %96 = vmatpush.msra.mxu0 0.0
  %97 = vmatpush.msra.mxu0 0.0
  %98 = vmatpush.msra.mxu0 0.0
  %99 = vmatpush.msra.mxu0 0.0
  %100 = vmatpush.msra.mxu0 %v36
  %101 = vmatpush.msra.mxu0 %v35
  %102 = vmatmul.f32.gmra.mxu0 %v39
  %v103 = vpop.f32.mrf.mxu0
  %v104 = vadd.f32 0.0, %v103
  %105 = vmatmul.f32.gmra.mxu0 %v42
  %v106 = vpop.f32.mrf.mxu0
  %v107 = vadd.f32 0.0, %v106
  %108 = vmatmul.f32.gmra.mxu0 %v45
  %v109 = vpop.f32.mrf.mxu0
  %v110 = vadd.f32 0.0, %v109
  %111 = vmatmul.f32.gmra.mxu0 %v48
  %v112 = vpop.f32.mrf.mxu0
  %v113 = vadd.f32 0.0, %v112
  %114 = vmatmul.f32.gmra.mxu0 %v51
  %v115 = vpop.f32.mrf.mxu0
  %v116 = vadd.f32 0.0, %v115
  %117 = vmatmul.f32.gmra.mxu0 %v54
  %v118 = vpop.f32.mrf.mxu0
  %v119 = vadd.f32 0.0, %v118
  %120 = vmatmul.f32.gmra.mxu0 %v57
  %v121 = vpop.f32.mrf.mxu0
  %v122 = vadd.f32 0.0, %v121
  %123 = vmatmul.f32.gmra.mxu0 %v60
  %v124 = vpop.f32.mrf.mxu0
  %v125 = vadd.f32 0.0, %v124
  %126 = vmatmul.f32.gmra.mxu0 %v63
  %v127 = vpop.f32.mrf.mxu0
  %v128 = vadd.f32 0.0, %v127
  %129 = vmatmul.f32.gmra.mxu0 %v66
  %v130 = vpop.f32.mrf.mxu0
  %v131 = vadd.f32 0.0, %v130
  %132 = vmatmul.f32.gmra.mxu0 %v69
  %v133 = vpop.f32.mrf.mxu0
  %v134 = vadd.f32 0.0, %v133
  %135 = vmatmul.f32.gmra.mxu0 %v72
  %v136 = vpop.f32.mrf.mxu0
  %v137 = vadd.f32 0.0, %v136
  %138 = vmatmul.f32.gmra.mxu0 %v75
  %v139 = vpop.f32.mrf.mxu0
  %v140 = vadd.f32 0.0, %v139
  %141 = vmatmul.f32.gmra.mxu0 %v78
  %v142 = vpop.f32.mrf.mxu0
  %v143 = vadd.f32 0.0, %v142
  %144 = vmatmul.f32.gmra.mxu0 %v81
  %v145 = vpop.f32.mrf.mxu0
  %v146 = vadd.f32 0.0, %v145
  %147 = vmatmul.f32.gmra.mxu0 %v84
  %v148 = vpop.f32.mrf.mxu0
  %v149 = vadd.f32 0.0, %v148
  %150 = vdwg.mxu0
  %v151 = vld [vmem:[%s1] sm:$0xf]
  %v152 = vld [vmem:[%s1 + $0x4] sm:$0xf]
  %v153 = vld [vmem:[%s1 + $0x8] sm:$0xf]
  %v154 = vld [vmem:[%s1 + $0xc] sm:$0xf]
  %v155 = vunpack.c.l.bf16 %v151
  %v156 = vunpack.c.l.bf16 %v152
  %v157 = vunpack.c.l.bf16 %v153
  %v158 = vunpack.c.l.bf16 %v154
  %v160 = vsel %vm37, %v155, 0
  %v163 = vsel %vm37, %v156, 0
  %v166 = vsel %vm37, %v157, 0
  %v169 = vsel %vm37, %v158, 0
  %171 = vmatpush.msra.mxu0 0.0
  %172 = vmatpush.msra.mxu0 0.0
  %173 = vmatpush.msra.mxu0 0.0
  %174 = vmatpush.msra.mxu0 0.0
  %175 = vmatpush.msra.mxu0 0.0
  %176 = vmatpush.msra.mxu0 0.0
  %177 = vmatpush.msra.mxu0 0.0
  %178 = vmatpush.msra.mxu0 0.0
  %179 = vmatpush.msra.mxu0 0.0
  %180 = vmatpush.msra.mxu0 0.0
  %181 = vmatpush.msra.mxu0 0.0
  %182 = vmatpush.msra.mxu0 0.0
  %183 = vmatpush.msra.mxu0 0.0
  %184 = vmatpush.msra.mxu0 0.0
  %185 = vmatpush.msra.mxu0 %v107
  %186 = vmatpush.msra.mxu0 %v104
  %187 = vmatmul.f32.gmra.mxu0 %v160
  %v188 = vpop.f32.mrf.mxu0
  %v189 = vadd.f32 0.0, %v188
  %190 = vmatmul.f32.gmra.mxu0 %v163
  %v191 = vpop.f32.mrf.mxu0
  %v192 = vadd.f32 0.0, %v191
  %193 = vmatmul.f32.gmra.mxu0 %v166
  %v194 = vpop.f32.mrf.mxu0
  %v195 = vadd.f32 0.0, %v194
  %196 = vmatmul.f32.gmra.mxu0 %v169
  %v197 = vpop.f32.mrf.mxu0
  %v198 = vadd.f32 0.0, %v197
  %199 = vdwg.mxu0
  %200 = vmatpush.msra.mxu0 0.0
  %201 = vmatpush.msra.mxu0 0.0
  %202 = vmatpush.msra.mxu0 0.0
  %203 = vmatpush.msra.mxu0 0.0
  %204 = vmatpush.msra.mxu0 0.0
  %205 = vmatpush.msra.mxu0 0.0
  %206 = vmatpush.msra.mxu0 0.0
  %207 = vmatpush.msra.mxu0 0.0
  %208 = vmatpush.msra.mxu0 0.0
  %209 = vmatpush.msra.mxu0 0.0
  %210 = vmatpush.msra.mxu0 0.0
  %211 = vmatpush.msra.mxu0 0.0
  %212 = vmatpush.msra.mxu0 0.0
  %213 = vmatpush.msra.mxu0 0.0
  %214 = vmatpush.msra.mxu0 %v113
  %215 = vmatpush.msra.mxu0 %v110
  %216 = vmatmul.f32.gmra.mxu0 %v160
  %v217 = vpop.f32.mrf.mxu0
  %v218 = vadd.f32 0.0, %v217
  %219 = vmatmul.f32.gmra.mxu0 %v163
  %v220 = vpop.f32.mrf.mxu0
  %v221 = vadd.f32 0.0, %v220
  %222 = vmatmul.f32.gmra.mxu0 %v166
  %v223 = vpop.f32.mrf.mxu0
  %v224 = vadd.f32 0.0, %v223
  %225 = vmatmul.f32.gmra.mxu0 %v169
  %v226 = vpop.f32.mrf.mxu0
  %v227 = vadd.f32 0.0, %v226
  %228 = vdwg.mxu0
  %229 = vmatpush.msra.mxu0 0.0
  %230 = vmatpush.msra.mxu0 0.0
  %231 = vmatpush.msra.mxu0 0.0
  %232 = vmatpush.msra.mxu0 0.0
  %233 = vmatpush.msra.mxu0 0.0
  %234 = vmatpush.msra.mxu0 0.0
  %235 = vmatpush.msra.mxu0 0.0
  %236 = vmatpush.msra.mxu0 0.0
  %237 = vmatpush.msra.mxu0 0.0
  %238 = vmatpush.msra.mxu0 0.0
  %239 = vmatpush.msra.mxu0 0.0
  %240 = vmatpush.msra.mxu0 0.0
  %241 = vmatpush.msra.mxu0 0.0
  %242 = vmatpush.msra.mxu0 0.0
  %243 = vmatpush.msra.mxu0 %v119
  %244 = vmatpush.msra.mxu0 %v116
  %245 = vmatmul.f32.gmra.mxu0 %v160
  %v246 = vpop.f32.mrf.mxu0
  %v247 = vadd.f32 0.0, %v246
  %248 = vmatmul.f32.gmra.mxu0 %v163
  %v249 = vpop.f32.mrf.mxu0
  %v250 = vadd.f32 0.0, %v249
  %251 = vmatmul.f32.gmra.mxu0 %v166
  %v252 = vpop.f32.mrf.mxu0
  %v253 = vadd.f32 0.0, %v252
  %254 = vmatmul.f32.gmra.mxu0 %v169
  %v255 = vpop.f32.mrf.mxu0
  %v256 = vadd.f32 0.0, %v255
  %257 = vdwg.mxu0
  %258 = vmatpush.msra.mxu0 0.0
  %259 = vmatpush.msra.mxu0 0.0
  %260 = vmatpush.msra.mxu0 0.0
  %261 = vmatpush.msra.mxu0 0.0
  %262 = vmatpush.msra.mxu0 0.0
  %263 = vmatpush.msra.mxu0 0.0
  %264 = vmatpush.msra.mxu0 0.0
  %265 = vmatpush.msra.mxu0 0.0
  %266 = vmatpush.msra.mxu0 0.0
  %267 = vmatpush.msra.mxu0 0.0
  %268 = vmatpush.msra.mxu0 0.0
  %269 = vmatpush.msra.mxu0 0.0
  %270 = vmatpush.msra.mxu0 0.0
  %271 = vmatpush.msra.mxu0 0.0
  %272 = vmatpush.msra.mxu0 %v125
  %273 = vmatpush.msra.mxu0 %v122
  %274 = vmatmul.f32.gmra.mxu0 %v160
  %v275 = vpop.f32.mrf.mxu0
  %v276 = vadd.f32 0.0, %v275
  %277 = vmatmul.f32.gmra.mxu0 %v163
  %v278 = vpop.f32.mrf.mxu0
  %v279 = vadd.f32 0.0, %v278
  %280 = vmatmul.f32.gmra.mxu0 %v166
  %v281 = vpop.f32.mrf.mxu0
  %v282 = vadd.f32 0.0, %v281
  %283 = vmatmul.f32.gmra.mxu0 %v169
  %v284 = vpop.f32.mrf.mxu0
  %v285 = vadd.f32 0.0, %v284
  %286 = vdwg.mxu0
  %287 = vmatpush.msra.mxu0 0.0
  %288 = vmatpush.msra.mxu0 0.0
  %289 = vmatpush.msra.mxu0 0.0
  %290 = vmatpush.msra.mxu0 0.0
  %291 = vmatpush.msra.mxu0 0.0
  %292 = vmatpush.msra.mxu0 0.0
  %293 = vmatpush.msra.mxu0 0.0
  %294 = vmatpush.msra.mxu0 0.0
  %295 = vmatpush.msra.mxu0 0.0
  %296 = vmatpush.msra.mxu0 0.0
  %297 = vmatpush.msra.mxu0 0.0
  %298 = vmatpush.msra.mxu0 0.0
  %299 = vmatpush.msra.mxu0 0.0
  %300 = vmatpush.msra.mxu0 0.0
  %301 = vmatpush.msra.mxu0 %v131
  %302 = vmatpush.msra.mxu0 %v128
  %303 = vmatmul.f32.gmra.mxu0 %v160
  %v304 = vpop.f32.mrf.mxu0
  %v305 = vadd.f32 0.0, %v304
  %306 = vmatmul.f32.gmra.mxu0 %v163
  %v307 = vpop.f32.mrf.mxu0
  %v308 = vadd.f32 0.0, %v307
  %309 = vmatmul.f32.gmra.mxu0 %v166
  %v310 = vpop.f32.mrf.mxu0
  %v311 = vadd.f32 0.0, %v310
  %312 = vmatmul.f32.gmra.mxu0 %v169
  %v313 = vpop.f32.mrf.mxu0
  %v314 = vadd.f32 0.0, %v313
  %315 = vdwg.mxu0
  %316 = vmatpush.msra.mxu0 0.0
  %317 = vmatpush.msra.mxu0 0.0
  %318 = vmatpush.msra.mxu0 0.0
  %319 = vmatpush.msra.mxu0 0.0
  %320 = vmatpush.msra.mxu0 0.0
  %321 = vmatpush.msra.mxu0 0.0
  %322 = vmatpush.msra.mxu0 0.0
  %323 = vmatpush.msra.mxu0 0.0
  %324 = vmatpush.msra.mxu0 0.0
  %325 = vmatpush.msra.mxu0 0.0
  %326 = vmatpush.msra.mxu0 0.0
  %327 = vmatpush.msra.mxu0 0.0
  %328 = vmatpush.msra.mxu0 0.0
  %329 = vmatpush.msra.mxu0 0.0
  %330 = vmatpush.msra.mxu0 %v137
  %331 = vmatpush.msra.mxu0 %v134
  %332 = vmatmul.f32.gmra.mxu0 %v160
  %v333 = vpop.f32.mrf.mxu0
  %v334 = vadd.f32 0.0, %v333
  %335 = vmatmul.f32.gmra.mxu0 %v163
  %v336 = vpop.f32.mrf.mxu0
  %v337 = vadd.f32 0.0, %v336
  %338 = vmatmul.f32.gmra.mxu0 %v166
  %v339 = vpop.f32.mrf.mxu0
  %v340 = vadd.f32 0.0, %v339
  %341 = vmatmul.f32.gmra.mxu0 %v169
  %v342 = vpop.f32.mrf.mxu0
  %v343 = vadd.f32 0.0, %v342
  %344 = vdwg.mxu0
  %345 = vmatpush.msra.mxu0 0.0
  %346 = vmatpush.msra.mxu0 0.0
  %347 = vmatpush.msra.mxu0 0.0
  %348 = vmatpush.msra.mxu0 0.0
  %349 = vmatpush.msra.mxu0 0.0
  %350 = vmatpush.msra.mxu0 0.0
  %351 = vmatpush.msra.mxu0 0.0
  %352 = vmatpush.msra.mxu0 0.0
  %353 = vmatpush.msra.mxu0 0.0
  %354 = vmatpush.msra.mxu0 0.0
  %355 = vmatpush.msra.mxu0 0.0
  %356 = vmatpush.msra.mxu0 0.0
  %357 = vmatpush.msra.mxu0 0.0
  %358 = vmatpush.msra.mxu0 0.0
  %359 = vmatpush.msra.mxu0 %v143
  %360 = vmatpush.msra.mxu0 %v140
  %361 = vmatmul.f32.gmra.mxu0 %v160
  %v362 = vpop.f32.mrf.mxu0
  %v363 = vadd.f32 0.0, %v362
  %364 = vmatmul.f32.gmra.mxu0 %v163
  %v365 = vpop.f32.mrf.mxu0
  %v366 = vadd.f32 0.0, %v365
  %367 = vmatmul.f32.gmra.mxu0 %v166
  %v368 = vpop.f32.mrf.mxu0
  %v369 = vadd.f32 0.0, %v368
  %370 = vmatmul.f32.gmra.mxu0 %v169
  %v371 = vpop.f32.mrf.mxu0
  %v372 = vadd.f32 0.0, %v371
  %373 = vdwg.mxu0
  %374 = vmatpush.msra.mxu0 0.0
  %375 = vmatpush.msra.mxu0 0.0
  %376 = vmatpush.msra.mxu0 0.0
  %377 = vmatpush.msra.mxu0 0.0
  %378 = vmatpush.msra.mxu0 0.0
  %379 = vmatpush.msra.mxu0 0.0
  %380 = vmatpush.msra.mxu0 0.0
  %381 = vmatpush.msra.mxu0 0.0
  %382 = vmatpush.msra.mxu0 0.0
  %383 = vmatpush.msra.mxu0 0.0
  %384 = vmatpush.msra.mxu0 0.0
  %385 = vmatpush.msra.mxu0 0.0
  %386 = vmatpush.msra.mxu0 0.0
  %387 = vmatpush.msra.mxu0 0.0
  %388 = vmatpush.msra.mxu0 %v149
  %389 = vmatpush.msra.mxu0 %v146
  %390 = vmatmul.f32.gmra.mxu0 %v160
  %v391 = vpop.f32.mrf.mxu0
  %v392 = vadd.f32 0.0, %v391
  %393 = vmatmul.f32.gmra.mxu0 %v163
  %v394 = vpop.f32.mrf.mxu0
  %v395 = vadd.f32 0.0, %v394
  %396 = vmatmul.f32.gmra.mxu0 %v166
  %v397 = vpop.f32.mrf.mxu0
  %v398 = vadd.f32 0.0, %v397
  %399 = vmatmul.f32.gmra.mxu0 %v169
  %v400 = vpop.f32.mrf.mxu0
  %v401 = vadd.f32 0.0, %v400
  %402 = vdwg.mxu0
  %v403 = vld [vmem:[%s3] sm:$0xff]
  %v404 = vld [vmem:[%s3 + $0x8] sm:$0xff]
  %v405 = vld [vmem:[%s3 + $0x10] sm:$0xff]
  %v406 = vld [vmem:[%s3 + $0x18] sm:$0xff]
  %v407 = vld [vmem:[%s3 + $0x20] sm:$0xff]
  %v408 = vld [vmem:[%s3 + $0x28] sm:$0xff]
  %v409 = vld [vmem:[%s3 + $0x30] sm:$0xff]
  %v410 = vld [vmem:[%s3 + $0x38] sm:$0xff]
  %v411 = vld [vmem:[%s3 + $0x40] sm:$0xff]
  %v412 = vld [vmem:[%s3 + $0x48] sm:$0xff]
  %v413 = vld [vmem:[%s3 + $0x50] sm:$0xff]
  %v414 = vld [vmem:[%s3 + $0x58] sm:$0xff]
  %v415 = vld [vmem:[%s3 + $0x60] sm:$0xff]
  %v416 = vld [vmem:[%s3 + $0x68] sm:$0xff]
  %v417 = vld [vmem:[%s3 + $0x70] sm:$0xff]
  %v418 = vld [vmem:[%s3 + $0x78] sm:$0xff]
  %v419 = vld [vmem:[%s3 + $0x80] sm:$0xff]
  %v420 = vld [vmem:[%s3 + $0x88] sm:$0xff]
  %v421 = vld [vmem:[%s3 + $0x90] sm:$0xff]
  %v422 = vld [vmem:[%s3 + $0x98] sm:$0xff]
  %v423 = vld [vmem:[%s3 + $0xa0] sm:$0xff]
  %v424 = vld [vmem:[%s3 + $0xa8] sm:$0xff]
  %v425 = vld [vmem:[%s3 + $0xb0] sm:$0xff]
  %v426 = vld [vmem:[%s3 + $0xb8] sm:$0xff]
  %v427 = vld [vmem:[%s3 + $0xc0] sm:$0xff]
  %v428 = vld [vmem:[%s3 + $0xc8] sm:$0xff]
  %v429 = vld [vmem:[%s3 + $0xd0] sm:$0xff]
  %v430 = vld [vmem:[%s3 + $0xd8] sm:$0xff]
  %v431 = vld [vmem:[%s3 + $0xe0] sm:$0xff]
  %v432 = vld [vmem:[%s3 + $0xe8] sm:$0xff]
  %v433 = vld [vmem:[%s3 + $0xf0] sm:$0xff]
  %v434 = vld [vmem:[%s3 + $0xf8] sm:$0xff]
  %v435 = vadd.f32 %v189, %v403
  %v436 = vadd.f32 %v192, %v404
  %v437 = vadd.f32 %v195, %v405
  %v438 = vadd.f32 %v198, %v406
  %v439 = vadd.f32 %v218, %v407
  %v440 = vadd.f32 %v221, %v408
  %v441 = vadd.f32 %v224, %v409
  %v442 = vadd.f32 %v227, %v410
  %v443 = vadd.f32 %v247, %v411
  %v444 = vadd.f32 %v250, %v412
  %v445 = vadd.f32 %v253, %v413
  %v446 = vadd.f32 %v256, %v414
  %v447 = vadd.f32 %v276, %v415
  %v448 = vadd.f32 %v279, %v416
  %v449 = vadd.f32 %v282, %v417
  %v450 = vadd.f32 %v285, %v418
  %v451 = vadd.f32 %v305, %v419
  %v452 = vadd.f32 %v308, %v420
  %v453 = vadd.f32 %v311, %v421
  %v454 = vadd.f32 %v314, %v422
  %v455 = vadd.f32 %v334, %v423
  %v456 = vadd.f32 %v337, %v424
  %v457 = vadd.f32 %v340, %v425
  %v458 = vadd.f32 %v343, %v426
  %v459 = vadd.f32 %v363, %v427
  %v460 = vadd.f32 %v366, %v428
  %v461 = vadd.f32 %v369, %v429
  %v462 = vadd.f32 %v372, %v430
  %v463 = vadd.f32 %v392, %v431
  %v464 = vadd.f32 %v395, %v432
  %v465 = vadd.f32 %v398, %v433
  %v466 = vadd.f32 %v401, %v434
  %vm467 = vcmask 261120
  %468 = vst.msk [vmem:[%s4] sm:$0xff] %vm467, %v435
  %469 = vst.msk [vmem:[%s4 + $0x8] sm:$0xff] %vm467, %v436
  %470 = vst.msk [vmem:[%s4 + $0x10] sm:$0xff] %vm467, %v437
  %471 = vst.msk [vmem:[%s4 + $0x18] sm:$0xff] %vm467, %v438
  %472 = vst.msk [vmem:[%s4 + $0x20] sm:$0xff] %vm467, %v439
  %473 = vst.msk [vmem:[%s4 + $0x28] sm:$0xff] %vm467, %v440
  %474 = vst.msk [vmem:[%s4 + $0x30] sm:$0xff] %vm467, %v441
  %475 = vst.msk [vmem:[%s4 + $0x38] sm:$0xff] %vm467, %v442
  %476 = vst.msk [vmem:[%s4 + $0x40] sm:$0xff] %vm467, %v443
  %477 = vst.msk [vmem:[%s4 + $0x48] sm:$0xff] %vm467, %v444
  %478 = vst.msk [vmem:[%s4 + $0x50] sm:$0xff] %vm467, %v445
  %479 = vst.msk [vmem:[%s4 + $0x58] sm:$0xff] %vm467, %v446
  %480 = vst.msk [vmem:[%s4 + $0x60] sm:$0xff] %vm467, %v447
  %481 = vst.msk [vmem:[%s4 + $0x68] sm:$0xff] %vm467, %v448
  %482 = vst.msk [vmem:[%s4 + $0x70] sm:$0xff] %vm467, %v449
  %483 = vst.msk [vmem:[%s4 + $0x78] sm:$0xff] %vm467, %v450
  %484 = vst.msk [vmem:[%s4 + $0x80] sm:$0xff] %vm467, %v451
  %485 = vst.msk [vmem:[%s4 + $0x88] sm:$0xff] %vm467, %v452
  %486 = vst.msk [vmem:[%s4 + $0x90] sm:$0xff] %vm467, %v453
  %487 = vst.msk [vmem:[%s4 + $0x98] sm:$0xff] %vm467, %v454
  %488 = vst.msk [vmem:[%s4 + $0xa0] sm:$0xff] %vm467, %v455
  %489 = vst.msk [vmem:[%s4 + $0xa8] sm:$0xff] %vm467, %v456
  %490 = vst.msk [vmem:[%s4 + $0xb0] sm:$0xff] %vm467, %v457
  %491 = vst.msk [vmem:[%s4 + $0xb8] sm:$0xff] %vm467, %v458
  %492 = vst.msk [vmem:[%s4 + $0xc0] sm:$0xff] %vm467, %v459
  %493 = vst.msk [vmem:[%s4 + $0xc8] sm:$0xff] %vm467, %v460
  %494 = vst.msk [vmem:[%s4 + $0xd0] sm:$0xff] %vm467, %v461
  %495 = vst.msk [vmem:[%s4 + $0xd8] sm:$0xff] %vm467, %v462
  %496 = vst.msk [vmem:[%s4 + $0xe0] sm:$0xff] %vm467, %v463
  %497 = vst.msk [vmem:[%s4 + $0xe8] sm:$0xff] %vm467, %v464
  %498 = vst.msk [vmem:[%s4 + $0xf0] sm:$0xff] %vm467, %v465
  %499 = vst.msk [vmem:[%s4 + $0xf8] sm:$0xff] %vm467, %v466
  // Predicated region
  $region18: #{tpu_custom_call.1} parent=0 // pred_check
    _
  $region19: #{tpu_custom_call.1} parent=0 // pred_check_branch
    %501 = sbr.rel (0) target = $region21
  $region20: #{tpu_custom_call.1} parent=0 // pred_region
    _
  $region21: #{tpu_custom_call.1} parent=0 // pred_fallthru
    _
  // Predicated region
  $region22: #{tpu_custom_call.1} parent=0 // pred_check
    _
  $region23: #{tpu_custom_call.1} parent=0 // pred_check_branch
    %503 = sbr.rel (0) target = $region25
  $region24: #{tpu_custom_call.1} parent=0 // pred_region
    _
  $region25: #{tpu_custom_call.1} parent=0 // pred_fallthru
    _

</llo_original>
